<compile_context>
chip_gen: v7x
topology: tpu7x:2x2x1
jax: 0.10.0
libtpu: 0.0.40
codegen_flags: <defaults>
</compile_context>

<pallas_src>
import functools

import jax
import jax.numpy as jnp
from jax.experimental import pallas as pl
from jax.experimental.pallas import tpu as pltpu

LN_EPS = 1e-5  # torch.nn.LayerNorm default


def mha_kernel(x_ref, g_ref, b_ref, wqkv_ref, wo_ref, bo_ref, o_ref,
               qkv_scr, ctx_scr, *, heads, dim_head, approx_recip):
    N, D = x_ref.shape
    inner = heads * dim_head
    cdt = qkv_scr.dtype  # MXU operand dtype (bf16 by default, f32 for exact path)

    # ---- LayerNorm over the feature axis (exact, f32 statistics) ----
    x = x_ref[...].astype(jnp.float32)                       # (N, D)
    mean = jnp.mean(x, axis=-1, keepdims=True)
    cent = x - mean
    var = jnp.mean(cent * cent, axis=-1, keepdims=True)
    xn = cent * jax.lax.rsqrt(var + jnp.float32(LN_EPS))
    xn = xn * g_ref[...].astype(jnp.float32) + b_ref[...].astype(jnp.float32)

    # ---- Fused, lane-dense QKV projection: (N, D) @ (D, 3*inner), f32 accumulate ----
    # (softmax scale is pre-folded into the Q columns of wqkv in the wrapper)
    qkv_scr[...] = jnp.dot(xn.astype(cdt), wqkv_ref[...],
                           preferred_element_type=jnp.float32).astype(cdt)

    # ---- Per-head attention (static loop; per-head state confined to VMEM) ----
    for h in range(heads):
        lo = h * dim_head
        hi = lo + dim_head
        q_h = qkv_scr[:, lo:hi]                               # (N, dh), already scaled
        k_h = qkv_scr[:, inner + lo:inner + hi]               # (N, dh)
        v_h = qkv_scr[:, 2 * inner + lo:2 * inner + hi]       # (N, dh)

        # QK^T without materializing k^T: contract the last dims directly.
        s = jax.lax.dot_general(q_h, k_h, (((1,), (1,)), ((), ())),
                                preferred_element_type=jnp.float32)   # (N, N) f32

        # Stable softmax with deferred normalization.
        m = jnp.max(s, axis=-1, keepdims=True)
        e = jnp.exp(s - m)                                    # unnormalized probs
        l = jnp.sum(e, axis=-1, keepdims=True)                # (N, 1)

        ctx = jnp.dot(e.astype(cdt), v_h,
                      preferred_element_type=jnp.float32)     # (N, dh) f32
        ctx = ctx * pl.reciprocal(l, approx=approx_recip)     # normalize (N,dh) only
        ctx_scr[:, lo:hi] = ctx.astype(cdt)                   # head h at lane offset

    # ---- Single full-depth output projection: (N, inner) @ (inner, D) + bias ----
    out = jnp.dot(ctx_scr[...], wo_ref[...], preferred_element_type=jnp.float32)
    out = out + bo_ref[...].astype(jnp.float32)
    o_ref[...] = out.astype(o_ref.dtype)


@functools.partial(jax.jit, static_argnames=("heads", "dim_head", "mxu_dtype"))
def attention(img, gamma, beta, w_qkv, w_out, b_out, *, heads, dim_head,
              mxu_dtype=jnp.bfloat16):
    """img: (B, N, D) -> (B, N, D).  Matches Attention.forward(img) with tab=None."""
    B, N, D = img.shape
    inner = heads * dim_head
    scale = float(dim_head) ** -0.5

    # Fold the softmax scale into the Q projection columns; cast weights for the MXU.
    wq, wk, wv = jnp.split(w_qkv, 3, axis=-1)                 # each (D, inner)
    wqkv_fused = jnp.concatenate(
        [wq.astype(jnp.float32) * jnp.float32(scale),
         wk.astype(jnp.float32),
         wv.astype(jnp.float32)], axis=-1).astype(mxu_dtype)  # (D, 3*inner)
    wo_c = w_out.astype(mxu_dtype)                            # (inner, D)

    gamma2d = gamma.reshape(1, D)
    beta2d = beta.reshape(1, D)
    bo2d = b_out.reshape(1, D)

    approx_recip = jnp.dtype(mxu_dtype) != jnp.dtype(jnp.float32)
    kernel = functools.partial(mha_kernel, heads=heads, dim_head=dim_head,
                               approx_recip=bool(approx_recip))

    return pl.pallas_call(
        kernel,
        out_shape=jax.ShapeDtypeStruct((B, N, D), img.dtype),
        grid_spec=pltpu.PrefetchScalarGridSpec(
            num_scalar_prefetch=0,
            grid=(B,),
            in_specs=[
                pl.BlockSpec((None, N, D), lambda b: (b, 0, 0)),      # img tokens
                pl.BlockSpec((1, D), lambda b: (0, 0)),               # LN gamma
                pl.BlockSpec((1, D), lambda b: (0, 0)),               # LN beta
                pl.BlockSpec((D, 3 * inner), lambda b: (0, 0)),       # fused Wqkv
                pl.BlockSpec((inner, D), lambda b: (0, 0)),           # Wo
                pl.BlockSpec((1, D), lambda b: (0, 0)),               # b_out
            ],
            out_specs=pl.BlockSpec((None, N, D), lambda b: (b, 0, 0)),
            scratch_shapes=[
                pltpu.VMEM((N, 3 * inner), mxu_dtype),                # fused qkv
                pltpu.VMEM((N, inner), mxu_dtype),                    # per-head ctx
            ]),
        compiler_params=pltpu.CompilerParams(
            dimension_semantics=("parallel",),        # batch axis -> megacore sharding
            vmem_limit_bytes=48 * 1024 * 1024),       # safe on v5e/v6e/v7x
    )(img, gamma2d, beta2d, wqkv_fused, wo_c, bo2d)


def init_params(key, dim, heads, dim_head, dtype=jnp.float32):
    """Synthetic params matching nn.LayerNorm / nn.Linear shapes (W stored (in, out))."""
    inner = heads * dim_head
    k1, k2, k3 = jax.random.split(key, 3)
    gamma = jnp.ones((dim,), dtype)
    beta = jnp.zeros((dim,), dtype)
    lim_q = 1.0 / (dim ** 0.5)
    w_qkv = jax.random.uniform(k1, (dim, 3 * inner), dtype, -lim_q, lim_q)
    lim_o = 1.0 / (inner ** 0.5)
    w_out = jax.random.uniform(k2, (inner, dim), dtype, -lim_o, lim_o)
    b_out = jax.random.uniform(k3, (dim,), dtype, -lim_o, lim_o)
    return gamma, beta, w_qkv, w_out, b_out


def attention_reference(img, gamma, beta, w_qkv, w_out, b_out, heads, dim_head):
    """Pure-JAX reference mirroring the PyTorch forward (tab=None, dropout=0)."""
    B, N, D = img.shape
    inner = heads * dim_head
    scale = float(dim_head) ** -0.5
    hi = jax.lax.Precision.HIGHEST

    x = img.astype(jnp.float32)
    mean = jnp.mean(x, -1, keepdims=True)
    var = jnp.mean((x - mean) ** 2, -1, keepdims=True)
    xn = (x - mean) * jax.lax.rsqrt(var + LN_EPS) * gamma + beta

    qkv = jnp.einsum("bnd,de->bne", xn, w_qkv, precision=hi)
    q, k, v = jnp.split(qkv, 3, axis=-1)
    to_heads = lambda t: t.reshape(B, N, heads, dim_head).transpose(0, 2, 1, 3)
    q, k, v = map(to_heads, (q, k, v))

    dots = jnp.einsum("bhqd,bhkd->bhqk", q, k, precision=hi) * scale
    attn = jax.nn.softmax(dots, axis=-1)
    ctx = jnp.einsum("bhqk,bhkd->bhqd", attn, v, precision=hi)
    ctx = ctx.transpose(0, 2, 1, 3).reshape(B, N, inner)
    return jnp.einsum("bne,ed->bnd", ctx, w_out, precision=hi) + b_out


if __name__ == "__main__":
    key = jax.random.PRNGKey(0)
    kx, kp = jax.random.split(key)

    # Small demo shapes consistent with the module (project_out=True).
    batch, seq, dim, heads, dim_head = 2, 8, 32, 4, 16

    img = jax.random.normal(kx, (batch, seq, dim), jnp.float32)
    gamma, beta, w_qkv, w_out, b_out = init_params(kp, dim, heads, dim_head)

    ref = attention_reference(img, gamma, beta, w_qkv, w_out, b_out, heads, dim_head)

    # Exact path (f32 MXU operands, exact reciprocal) -> tight tolerance.
    out_f32 = attention(img, gamma, beta, w_qkv, w_out, b_out,
                        heads=heads, dim_head=dim_head, mxu_dtype=jnp.float32)
    out_f32 = jax.block_until_ready(out_f32)
    assert out_f32.shape == ref.shape, "shape mismatch vs reference"
    assert jnp.allclose(out_f32, ref, atol=2e-3, rtol=2e-3), "f32 path mismatch"

    # Default fast path (bf16 MXU operands, approx reciprocal) -> bf16-level tolerance.
    out_bf = attention(img, gamma, beta, w_qkv, w_out, b_out,
                       heads=heads, dim_head=dim_head)
    out_bf = jax.block_until_ready(out_bf)
    assert out_bf.shape == ref.shape, "shape mismatch vs reference"
    assert jnp.allclose(out_bf, ref, atol=3e-2, rtol=3e-2), "bf16 path mismatch"

    print("KERNEL_OK")
</pallas_src>

<mosaic_0001>
module attributes {stable_mosaic.version = 11 : i64} {
  func.func @mha_kernel(%arg0: i32, %arg1: memref<1x8x32xf32, #tpu.memory_space<vmem>>, %arg2: memref<1x32xf32, #tpu.memory_space<vmem>>, %arg3: memref<1x32xf32, #tpu.memory_space<vmem>>, %arg4: memref<32x192xf32, #tpu.memory_space<vmem>>, %arg5: memref<64x32xf32, #tpu.memory_space<vmem>>, %arg6: memref<1x32xf32, #tpu.memory_space<vmem>>, %arg7: memref<1x8x32xf32, #tpu.memory_space<vmem>>, %arg8: memref<8x192xf32, #tpu.memory_space<vmem>>, %arg9: memref<8x64xf32, #tpu.memory_space<vmem>>) attributes {dimension_semantics = [#tpu.dimension_semantics<parallel>], iteration_bounds = array<i64: 2>, scalar_prefetch = 0 : i64, scratch_operands = 2 : i64, tpu.core_type = #tpu.core_type<tc>, window_params = [{transform_indices = @transform_0, window_bounds = array<i64: 1, 8, 32>}, {pipeline_mode = #tpu.pipeline_mode<synchronous>, transform_indices = @transform_1, window_bounds = array<i64: 1, 32>}, {pipeline_mode = #tpu.pipeline_mode<synchronous>, transform_indices = @transform_2, window_bounds = array<i64: 1, 32>}, {pipeline_mode = #tpu.pipeline_mode<synchronous>, transform_indices = @transform_3, window_bounds = array<i64: 32, 192>}, {pipeline_mode = #tpu.pipeline_mode<synchronous>, transform_indices = @transform_4, window_bounds = array<i64: 64, 32>}, {pipeline_mode = #tpu.pipeline_mode<synchronous>, transform_indices = @transform_5, window_bounds = array<i64: 1, 32>}, {transform_indices = @transform_6, window_bounds = array<i64: 1, 8, 32>}]} {
    %c0 = arith.constant 0 : index
    %c0_0 = arith.constant 0 : index
    %c0_1 = arith.constant 0 : index
    %0 = vector.load %arg1[%c0, %c0_0, %c0_1] : memref<1x8x32xf32, #tpu.memory_space<vmem>>, vector<1x8x32xf32>
    %1 = vector.shape_cast %0 : vector<1x8x32xf32> to vector<8x32xf32>
    %cst = arith.constant dense<0.000000e+00> : vector<8xf32>
    %2 = vector.multi_reduction <add>, %1, %cst [1] : vector<8x32xf32> to vector<8xf32>
    %3 = vector.shape_cast %2 : vector<8xf32> to vector<8x1xf32>
    %cst_2 = arith.constant 3.200000e+01 : f32
    %4 = vector.broadcast %cst_2 : f32 to vector<8x1xf32>
    %5 = arith.divf %3, %4 : vector<8x1xf32>
    %6 = vector.broadcast %5 : vector<8x1xf32> to vector<8x32xf32>
    %7 = arith.subf %1, %6 : vector<8x32xf32>
    %8 = arith.mulf %7, %7 : vector<8x32xf32>
    %cst_3 = arith.constant dense<0.000000e+00> : vector<8xf32>
    %9 = vector.multi_reduction <add>, %8, %cst_3 [1] : vector<8x32xf32> to vector<8xf32>
    %10 = vector.shape_cast %9 : vector<8xf32> to vector<8x1xf32>
    %cst_4 = arith.constant 3.200000e+01 : f32
    %11 = vector.broadcast %cst_4 : f32 to vector<8x1xf32>
    %12 = arith.divf %10, %11 : vector<8x1xf32>
    %cst_5 = arith.constant 9.99999974E-6 : f32
    %13 = vector.broadcast %cst_5 : f32 to vector<8x1xf32>
    %14 = arith.addf %12, %13 : vector<8x1xf32>
    %15 = math.rsqrt %14 : vector<8x1xf32>
    %16 = vector.broadcast %15 : vector<8x1xf32> to vector<8x32xf32>
    %17 = arith.mulf %7, %16 : vector<8x32xf32>
    %c0_6 = arith.constant 0 : index
    %c0_7 = arith.constant 0 : index
    %18 = vector.load %arg2[%c0_6, %c0_7] : memref<1x32xf32, #tpu.memory_space<vmem>>, vector<1x32xf32>
    %19 = vector.broadcast %18 : vector<1x32xf32> to vector<8x32xf32>
    %20 = arith.mulf %17, %19 : vector<8x32xf32>
    %c0_8 = arith.constant 0 : index
    %c0_9 = arith.constant 0 : index
    %21 = vector.load %arg3[%c0_8, %c0_9] : memref<1x32xf32, #tpu.memory_space<vmem>>, vector<1x32xf32>
    %22 = vector.broadcast %21 : vector<1x32xf32> to vector<8x32xf32>
    %23 = arith.addf %20, %22 : vector<8x32xf32>
    %c0_10 = arith.constant 0 : index
    %c0_11 = arith.constant 0 : index
    %24 = vector.load %arg4[%c0_10, %c0_11] : memref<32x192xf32, #tpu.memory_space<vmem>>, vector<32x192xf32>
    %cst_12 = arith.constant dense<0.000000e+00> : vector<8x192xf32>
    %25 = tpu.matmul %23, %24, %cst_12 {dimension_numbers = #tpu.dot_dimension_numbers<[1], [0], [0], [1], [0, 0, 1, 1], [], []>} : vector<8x32xf32>, vector<32x192xf32>, vector<8x192xf32> -> vector<8x192xf32>
    %c0_13 = arith.constant 0 : index
    %c0_14 = arith.constant 0 : index
    %26 = vector.load %arg8[%c0_13, %c0_14] : memref<8x192xf32, #tpu.memory_space<vmem>>, vector<8x192xf32>
    tpu.vector_store %arg8[%c0_13, %c0_14], %25 {strides = array<i32>} : memref<8x192xf32, #tpu.memory_space<vmem>>, vector<8x192xf32>,
    %c0_15 = arith.constant 0 : index
    %c0_16 = arith.constant 0 : index
    %27 = vector.load %arg8[%c0_15, %c0_16] : memref<8x192xf32, #tpu.memory_space<vmem>>, vector<8x16xf32>
    %c0_17 = arith.constant 0 : index
    %c64 = arith.constant 64 : index
    %28 = vector.load %arg8[%c0_17, %c64] : memref<8x192xf32, #tpu.memory_space<vmem>>, vector<8x16xf32>
    %c0_18 = arith.constant 0 : index
    %c128 = arith.constant 128 : index
    %29 = vector.load %arg8[%c0_18, %c128] : memref<8x192xf32, #tpu.memory_space<vmem>>, vector<8x16xf32>
    %cst_19 = arith.constant dense<0.000000e+00> : vector<8x8xf32>
    %30 = tpu.matmul %27, %28, %cst_19 {dimension_numbers = #tpu.dot_dimension_numbers<[1], [1], [0], [0], [0, 0, 1, 0], [], []>} : vector<8x16xf32>, vector<8x16xf32>, vector<8x8xf32> -> vector<8x8xf32>
    %cst_20 = arith.constant dense<0xFF800000> : vector<8xf32>
    %31 = vector.multi_reduction <maximumf>, %30, %cst_20 [1] : vector<8x8xf32> to vector<8xf32>
    %32 = vector.shape_cast %31 : vector<8xf32> to vector<8x1xf32>
    %33 = vector.broadcast %32 : vector<8x1xf32> to vector<8x8xf32>
    %34 = arith.subf %30, %33 : vector<8x8xf32>
    %35 = math.exp %34 : vector<8x8xf32>
    %cst_21 = arith.constant dense<0.000000e+00> : vector<8xf32>
    %36 = vector.multi_reduction <add>, %35, %cst_21 [1] : vector<8x8xf32> to vector<8xf32>
    %37 = vector.shape_cast %36 : vector<8xf32> to vector<8x1xf32>
    %cst_22 = arith.constant dense<0.000000e+00> : vector<8x16xf32>
    %38 = tpu.matmul %35, %29, %cst_22 {dimension_numbers = #tpu.dot_dimension_numbers<[1], [0], [0], [1], [0, 0, 1, 1], [], []>} : vector<8x8xf32>, vector<8x16xf32>, vector<8x16xf32> -> vector<8x16xf32>
    %39 = tpu.reciprocal %37 : vector<8x1xf32> -> vector<8x1xf32>
    %40 = vector.broadcast %39 : vector<8x1xf32> to vector<8x16xf32>
    %41 = arith.mulf %38, %40 : vector<8x16xf32>
    %c0_23 = arith.constant 0 : index
    %c0_24 = arith.constant 0 : index
    %42 = vector.load %arg9[%c0_23, %c0_24] : memref<8x64xf32, #tpu.memory_space<vmem>>, vector<8x16xf32>
    tpu.vector_store %arg9[%c0_23, %c0_24], %41 {strides = array<i32>} : memref<8x64xf32, #tpu.memory_space<vmem>>, vector<8x16xf32>,
    %c0_25 = arith.constant 0 : index
    %c16 = arith.constant 16 : index
    %43 = vector.load %arg8[%c0_25, %c16] : memref<8x192xf32, #tpu.memory_space<vmem>>, vector<8x16xf32>
    %c0_26 = arith.constant 0 : index
    %c80 = arith.constant 80 : index
    %44 = vector.load %arg8[%c0_26, %c80] : memref<8x192xf32, #tpu.memory_space<vmem>>, vector<8x16xf32>
    %c0_27 = arith.constant 0 : index
    %c144 = arith.constant 144 : index
    %45 = vector.load %arg8[%c0_27, %c144] : memref<8x192xf32, #tpu.memory_space<vmem>>, vector<8x16xf32>
    %cst_28 = arith.constant dense<0.000000e+00> : vector<8x8xf32>
    %46 = tpu.matmul %43, %44, %cst_28 {dimension_numbers = #tpu.dot_dimension_numbers<[1], [1], [0], [0], [0, 0, 1, 0], [], []>} : vector<8x16xf32>, vector<8x16xf32>, vector<8x8xf32> -> vector<8x8xf32>
    %cst_29 = arith.constant dense<0xFF800000> : vector<8xf32>
    %47 = vector.multi_reduction <maximumf>, %46, %cst_29 [1] : vector<8x8xf32> to vector<8xf32>
    %48 = vector.shape_cast %47 : vector<8xf32> to vector<8x1xf32>
    %49 = vector.broadcast %48 : vector<8x1xf32> to vector<8x8xf32>
    %50 = arith.subf %46, %49 : vector<8x8xf32>
    %51 = math.exp %50 : vector<8x8xf32>
    %cst_30 = arith.constant dense<0.000000e+00> : vector<8xf32>
    %52 = vector.multi_reduction <add>, %51, %cst_30 [1] : vector<8x8xf32> to vector<8xf32>
    %53 = vector.shape_cast %52 : vector<8xf32> to vector<8x1xf32>
    %cst_31 = arith.constant dense<0.000000e+00> : vector<8x16xf32>
    %54 = tpu.matmul %51, %45, %cst_31 {dimension_numbers = #tpu.dot_dimension_numbers<[1], [0], [0], [1], [0, 0, 1, 1], [], []>} : vector<8x8xf32>, vector<8x16xf32>, vector<8x16xf32> -> vector<8x16xf32>
    %55 = tpu.reciprocal %53 : vector<8x1xf32> -> vector<8x1xf32>
    %56 = vector.broadcast %55 : vector<8x1xf32> to vector<8x16xf32>
    %57 = arith.mulf %54, %56 : vector<8x16xf32>
    %c0_32 = arith.constant 0 : index
    %c16_33 = arith.constant 16 : index
    %58 = vector.load %arg9[%c0_32, %c16_33] : memref<8x64xf32, #tpu.memory_space<vmem>>, vector<8x16xf32>
    tpu.vector_store %arg9[%c0_32, %c16_33], %57 {strides = array<i32>} : memref<8x64xf32, #tpu.memory_space<vmem>>, vector<8x16xf32>,
    %c0_34 = arith.constant 0 : index
    %c32 = arith.constant 32 : index
    %59 = vector.load %arg8[%c0_34, %c32] : memref<8x192xf32, #tpu.memory_space<vmem>>, vector<8x16xf32>
    %c0_35 = arith.constant 0 : index
    %c96 = arith.constant 96 : index
    %60 = vector.load %arg8[%c0_35, %c96] : memref<8x192xf32, #tpu.memory_space<vmem>>, vector<8x16xf32>
    %c0_36 = arith.constant 0 : index
    %c160 = arith.constant 160 : index
    %61 = vector.load %arg8[%c0_36, %c160] : memref<8x192xf32, #tpu.memory_space<vmem>>, vector<8x16xf32>
    %cst_37 = arith.constant dense<0.000000e+00> : vector<8x8xf32>
    %62 = tpu.matmul %59, %60, %cst_37 {dimension_numbers = #tpu.dot_dimension_numbers<[1], [1], [0], [0], [0, 0, 1, 0], [], []>} : vector<8x16xf32>, vector<8x16xf32>, vector<8x8xf32> -> vector<8x8xf32>
    %cst_38 = arith.constant dense<0xFF800000> : vector<8xf32>
    %63 = vector.multi_reduction <maximumf>, %62, %cst_38 [1] : vector<8x8xf32> to vector<8xf32>
    %64 = vector.shape_cast %63 : vector<8xf32> to vector<8x1xf32>
    %65 = vector.broadcast %64 : vector<8x1xf32> to vector<8x8xf32>
    %66 = arith.subf %62, %65 : vector<8x8xf32>
    %67 = math.exp %66 : vector<8x8xf32>
    %cst_39 = arith.constant dense<0.000000e+00> : vector<8xf32>
    %68 = vector.multi_reduction <add>, %67, %cst_39 [1] : vector<8x8xf32> to vector<8xf32>
    %69 = vector.shape_cast %68 : vector<8xf32> to vector<8x1xf32>
    %cst_40 = arith.constant dense<0.000000e+00> : vector<8x16xf32>
    %70 = tpu.matmul %67, %61, %cst_40 {dimension_numbers = #tpu.dot_dimension_numbers<[1], [0], [0], [1], [0, 0, 1, 1], [], []>} : vector<8x8xf32>, vector<8x16xf32>, vector<8x16xf32> -> vector<8x16xf32>
    %71 = tpu.reciprocal %69 : vector<8x1xf32> -> vector<8x1xf32>
    %72 = vector.broadcast %71 : vector<8x1xf32> to vector<8x16xf32>
    %73 = arith.mulf %70, %72 : vector<8x16xf32>
    %c0_41 = arith.constant 0 : index
    %c32_42 = arith.constant 32 : index
    %74 = vector.load %arg9[%c0_41, %c32_42] : memref<8x64xf32, #tpu.memory_space<vmem>>, vector<8x16xf32>
    tpu.vector_store %arg9[%c0_41, %c32_42], %73 {strides = array<i32>} : memref<8x64xf32, #tpu.memory_space<vmem>>, vector<8x16xf32>,
    %c0_43 = arith.constant 0 : index
    %c48 = arith.constant 48 : index
    %75 = vector.load %arg8[%c0_43, %c48] : memref<8x192xf32, #tpu.memory_space<vmem>>, vector<8x16xf32>
    %c0_44 = arith.constant 0 : index
    %c112 = arith.constant 112 : index
    %76 = vector.load %arg8[%c0_44, %c112] : memref<8x192xf32, #tpu.memory_space<vmem>>, vector<8x16xf32>
    %c0_45 = arith.constant 0 : index
    %c176 = arith.constant 176 : index
    %77 = vector.load %arg8[%c0_45, %c176] : memref<8x192xf32, #tpu.memory_space<vmem>>, vector<8x16xf32>
    %cst_46 = arith.constant dense<0.000000e+00> : vector<8x8xf32>
    %78 = tpu.matmul %75, %76, %cst_46 {dimension_numbers = #tpu.dot_dimension_numbers<[1], [1], [0], [0], [0, 0, 1, 0], [], []>} : vector<8x16xf32>, vector<8x16xf32>, vector<8x8xf32> -> vector<8x8xf32>
    %cst_47 = arith.constant dense<0xFF800000> : vector<8xf32>
    %79 = vector.multi_reduction <maximumf>, %78, %cst_47 [1] : vector<8x8xf32> to vector<8xf32>
    %80 = vector.shape_cast %79 : vector<8xf32> to vector<8x1xf32>
    %81 = vector.broadcast %80 : vector<8x1xf32> to vector<8x8xf32>
    %82 = arith.subf %78, %81 : vector<8x8xf32>
    %83 = math.exp %82 : vector<8x8xf32>
    %cst_48 = arith.constant dense<0.000000e+00> : vector<8xf32>
    %84 = vector.multi_reduction <add>, %83, %cst_48 [1] : vector<8x8xf32> to vector<8xf32>
    %85 = vector.shape_cast %84 : vector<8xf32> to vector<8x1xf32>
    %cst_49 = arith.constant dense<0.000000e+00> : vector<8x16xf32>
    %86 = tpu.matmul %83, %77, %cst_49 {dimension_numbers = #tpu.dot_dimension_numbers<[1], [0], [0], [1], [0, 0, 1, 1], [], []>} : vector<8x8xf32>, vector<8x16xf32>, vector<8x16xf32> -> vector<8x16xf32>
    %87 = tpu.reciprocal %85 : vector<8x1xf32> -> vector<8x1xf32>
    %88 = vector.broadcast %87 : vector<8x1xf32> to vector<8x16xf32>
    %89 = arith.mulf %86, %88 : vector<8x16xf32>
    %c0_50 = arith.constant 0 : index
    %c48_51 = arith.constant 48 : index
    %90 = vector.load %arg9[%c0_50, %c48_51] : memref<8x64xf32, #tpu.memory_space<vmem>>, vector<8x16xf32>
    tpu.vector_store %arg9[%c0_50, %c48_51], %89 {strides = array<i32>} : memref<8x64xf32, #tpu.memory_space<vmem>>, vector<8x16xf32>,
    %c0_52 = arith.constant 0 : index
    %c0_53 = arith.constant 0 : index
    %91 = vector.load %arg9[%c0_52, %c0_53] : memref<8x64xf32, #tpu.memory_space<vmem>>, vector<8x64xf32>
    %c0_54 = arith.constant 0 : index
    %c0_55 = arith.constant 0 : index
    %92 = vector.load %arg5[%c0_54, %c0_55] : memref<64x32xf32, #tpu.memory_space<vmem>>, vector<64x32xf32>
    %cst_56 = arith.constant dense<0.000000e+00> : vector<8x32xf32>
    %93 = tpu.matmul %91, %92, %cst_56 {dimension_numbers = #tpu.dot_dimension_numbers<[1], [0], [0], [1], [0, 0, 1, 1], [], []>} : vector<8x64xf32>, vector<64x32xf32>, vector<8x32xf32> -> vector<8x32xf32>
    %c0_57 = arith.constant 0 : index
    %c0_58 = arith.constant 0 : index
    %94 = vector.load %arg6[%c0_57, %c0_58] : memref<1x32xf32, #tpu.memory_space<vmem>>, vector<1x32xf32>
    %95 = vector.broadcast %94 : vector<1x32xf32> to vector<8x32xf32>
    %96 = arith.addf %93, %95 : vector<8x32xf32>
    %c0_59 = arith.constant 0 : index
    %c0_60 = arith.constant 0 : index
    %c0_61 = arith.constant 0 : index
    %97 = vector.load %arg7[%c0_59, %c0_60, %c0_61] : memref<1x8x32xf32, #tpu.memory_space<vmem>>, vector<1x8x32xf32>
    %98 = vector.shape_cast %97 : vector<1x8x32xf32> to vector<8x32xf32>
    %99 = vector.shape_cast %96 : vector<8x32xf32> to vector<1x8x32xf32>
    tpu.vector_store %arg7[%c0_59, %c0_60, %c0_61], %99 {strides = array<i32>} : memref<1x8x32xf32, #tpu.memory_space<vmem>>, vector<1x8x32xf32>,
    return
  }
  func.func @transform_0(%arg0: i32) -> (i32, i32, i32) {
    %c0_i32 = arith.constant 0 : i32
    %c0_i32_0 = arith.constant 0 : i32
    %c0_i32_1 = arith.constant 0 : i32
    return %arg0, %c0_i32, %c0_i32_0 : i32, i32, i32
  }
  func.func @transform_1(%arg0: i32) -> (i32, i32) {
    %c0_i32 = arith.constant 0 : i32
    %c0_i32_0 = arith.constant 0 : i32
    %c0_i32_1 = arith.constant 0 : i32
    return %c0_i32, %c0_i32_0 : i32, i32
  }
  func.func @transform_2(%arg0: i32) -> (i32, i32) {
    %c0_i32 = arith.constant 0 : i32
    %c0_i32_0 = arith.constant 0 : i32
    %c0_i32_1 = arith.constant 0 : i32
    return %c0_i32, %c0_i32_0 : i32, i32
  }
  func.func @transform_3(%arg0: i32) -> (i32, i32) {
    %c0_i32 = arith.constant 0 : i32
    %c0_i32_0 = arith.constant 0 : i32
    %c0_i32_1 = arith.constant 0 : i32
    return %c0_i32, %c0_i32_0 : i32, i32
  }
  func.func @transform_4(%arg0: i32) -> (i32, i32) {
    %c0_i32 = arith.constant 0 : i32
    %c0_i32_0 = arith.constant 0 : i32
    %c0_i32_1 = arith.constant 0 : i32
    return %c0_i32, %c0_i32_0 : i32, i32
  }
  func.func @transform_5(%arg0: i32) -> (i32, i32) {
    %c0_i32 = arith.constant 0 : i32
    %c0_i32_0 = arith.constant 0 : i32
    %c0_i32_1 = arith.constant 0 : i32
    return %c0_i32, %c0_i32_0 : i32, i32
  }
  func.func @transform_6(%arg0: i32) -> (i32, i32, i32) {
    %c0_i32 = arith.constant 0 : i32
    %c0_i32_0 = arith.constant 0 : i32
    %c0_i32_1 = arith.constant 0 : i32
    return %arg0, %c0_i32, %c0_i32_0 : i32, i32, i32
  }
}

</mosaic_0001>

<llo_original>
// kernel: attention.1
$region0: #{attention.1}
  #allocation0 [shape = 'u32[]', space=smem, size = 0x4, offset = 0x4, fixed_abs, tag = 'smem constant byte address 0x4 - core index']
  #allocation1 [shape = 'u32[144,128]{1,0:T(1,128)}', space=vmem, size = 0x12000, scoped, tag = 'internal scratch']
  #allocation2 [shape = 'f32[8,192]{1,0:T(8,128)}', space=vmem, size = 0x2000, scoped, tag = 'scratch operand']
  #allocation3 [shape = 'f32[8,64]{1,0:T(8,128)}', space=vmem, size = 0x1000, scoped, tag = 'scratch operand']
  %s0 = inlined_call_operand.vmem [shape: f32[2,8,32], index: 0, kind: input, shape index: {}]
  %s1 = inlined_call_operand.vmem [shape: f32[1,32], index: 1, kind: input, shape index: {}]
  %s2 = inlined_call_operand.vmem [shape: f32[1,32], index: 2, kind: input, shape index: {}]
  %s3 = inlined_call_operand.vmem [shape: f32[32,192], index: 3, kind: input, shape index: {}]
  %s4 = inlined_call_operand.vmem [shape: f32[64,32], index: 4, kind: input, shape index: {}]
  %s5 = inlined_call_operand.vmem [shape: f32[1,32], index: 5, kind: input, shape index: {}]
  %s6 = inlined_call_operand.hbm [shape: f32[2,8,32], index: 6, kind: output, shape index: {}]
  %s7 = sld [smem:[#allocation0]]
  $region57: #{attention.1} parent=0
    _
  %s9 = ssub.s32 1, %s7
  %s10 = scalar_select 0, %s9, %s7
  $region1: #{attention.1} parent=0
    #allocation4 [shape = 'u8[8192]{0}', space=vmem, size = 0x2000, scoped, tag = 'output window, operand 0']
    #allocation5 [shape = 's32[2]{0}', space=sflag, size = 0x8, scoped, tag = 'scoped memory for attention.1']
    %11 = vsyncpa [#allocation5], 0
    %s12 = scalar_lea.sflag [#allocation5], 1
    %13 = vsyncpa %s12, 0
    loop: start=0, step=1, limit=4
    $region2: #{attention.1} parent=1 // loop_pre_header
      _
    $region3: #{attention.1} parent=1 // loop_header
      %s15 = sphi 0, %s19
      %p16 = scmp.ge.s32.totalorder %s15, 4
      %s25 = sphi 0, %s27
      %s28 = sphi 0, %s25
      %s29 = sphi 0, %s28
      %s45 = sphi 0, %s29
      %s49 = sphi 0, %s49
      %s51 = sphi 0, %s49
      %s52 = sphi 0, %s51
      %s66 = sphi 0, %s52
      %s70 = sphi 0, %s70
      %s72 = sphi 0, %s70
      %s73 = sphi 0, %s72
      %s87 = sphi 0, %s73
      %s91 = sphi 0, %s91
      %s93 = sphi 0, %s91
      %s94 = sphi 0, %s93
      %s108 = sphi 0, %s94
      %s112 = sphi 0, %s112
      %s114 = sphi 0, %s112
      %s115 = sphi 0, %s114
      %s129 = sphi 0, %s115
      %s133 = sphi 0, %s133
      %s135 = sphi 0, %s133
      %s136 = sphi 0, %s135
      %s150 = sphi 0, %s136
      %s156 = sphi 0, %s158
      %s159 = sphi 0, %s156
      %s160 = sphi 0, %s159
      %s176 = sphi 0, %s160
    $region4: #{attention.1} parent=1 // loop_header_branch
      %18 = sbr.rel (%p16) target = $region8
    $region5: #{attention.1} parent=1 // loop_body
      %s20 = ssub.s32 %s15, 1
      %s21 = ssub.s32 %s15, 2
      %s22 = sadd.s32 %s15, 1
      %s23 = ssub.s32 %s15, %s22
      %p24 = scmp.eq.s32.totalorder %s23, 0
      %s26 = sadd.s32 %s25, 1
      %s27 = scalar_select %p24, %s25, %s26
      %p30 = pneg %p24
      %p31 = scmp.eq.s32.totalorder %s15, 1
      %p32 = por %p30, %p31
      %p33 = scmp.ne.s32.totalorder %s25, %s28
      %p34 = scmp.eq.s32.totalorder %s15, 0
      %p35 = por %p33, %p34
      %p36 = scmp.ne.s32.totalorder %s25, %s28
      %p37 = scmp.eq.s32.totalorder %s20, 1
      %p38 = por %p36, %p37
      %p39 = scmp.ne.s32.totalorder %s28, %s29
      %p40 = scmp.eq.s32.totalorder %s20, 0
      %p41 = por %p39, %p40
      %p42 = scmp.ne.s32.totalorder %s28, %s29
      %p43 = scmp.eq.s32.totalorder %s21, 1
      %p44 = por %p42, %p43
      %p46 = scmp.ne.s32.totalorder %s29, %s45
      %p47 = scmp.eq.s32.totalorder %s21, 0
      %p48 = por %p46, %p47
      %s50 = sadd.s32 %s49, 1
      %p53 = scmp.eq.s32.totalorder %s15, 1
      %p54 = scmp.ne.s32.totalorder %s49, %s51
      %p55 = scmp.eq.s32.totalorder %s15, 0
      %p56 = por %p54, %p55
      %p57 = scmp.ne.s32.totalorder %s49, %s51
      %p58 = scmp.eq.s32.totalorder %s20, 1
      %p59 = por %p57, %p58
      %p60 = scmp.ne.s32.totalorder %s51, %s52
      %p61 = scmp.eq.s32.totalorder %s20, 0
      %p62 = por %p60, %p61
      %p63 = scmp.ne.s32.totalorder %s51, %s52
      %p64 = scmp.eq.s32.totalorder %s21, 1
      %p65 = por %p63, %p64
      %p67 = scmp.ne.s32.totalorder %s52, %s66
      %p68 = scmp.eq.s32.totalorder %s21, 0
      %p69 = por %p67, %p68
      %s71 = sadd.s32 %s70, 1
      %p74 = scmp.eq.s32.totalorder %s15, 1
      %p75 = scmp.ne.s32.totalorder %s70, %s72
      %p76 = scmp.eq.s32.totalorder %s15, 0
      %p77 = por %p75, %p76
      %p78 = scmp.ne.s32.totalorder %s70, %s72
      %p79 = scmp.eq.s32.totalorder %s20, 1
      %p80 = por %p78, %p79
      %p81 = scmp.ne.s32.totalorder %s72, %s73
      %p82 = scmp.eq.s32.totalorder %s20, 0
      %p83 = por %p81, %p82
      %p84 = scmp.ne.s32.totalorder %s72, %s73
      %p85 = scmp.eq.s32.totalorder %s21, 1
      %p86 = por %p84, %p85
      %p88 = scmp.ne.s32.totalorder %s73, %s87
      %p89 = scmp.eq.s32.totalorder %s21, 0
      %p90 = por %p88, %p89
      %s92 = sadd.s32 %s91, 1
      %p95 = scmp.eq.s32.totalorder %s15, 1
      %p96 = scmp.ne.s32.totalorder %s91, %s93
      %p97 = scmp.eq.s32.totalorder %s15, 0
      %p98 = por %p96, %p97
      %p99 = scmp.ne.s32.totalorder %s91, %s93
      %p100 = scmp.eq.s32.totalorder %s20, 1
      %p101 = por %p99, %p100
      %p102 = scmp.ne.s32.totalorder %s93, %s94
      %p103 = scmp.eq.s32.totalorder %s20, 0
      %p104 = por %p102, %p103
      %p105 = scmp.ne.s32.totalorder %s93, %s94
      %p106 = scmp.eq.s32.totalorder %s21, 1
      %p107 = por %p105, %p106
      %p109 = scmp.ne.s32.totalorder %s94, %s108
      %p110 = scmp.eq.s32.totalorder %s21, 0
      %p111 = por %p109, %p110
      %s113 = sadd.s32 %s112, 1
      %p116 = scmp.eq.s32.totalorder %s15, 1
      %p117 = scmp.ne.s32.totalorder %s112, %s114
      %p118 = scmp.eq.s32.totalorder %s15, 0
      %p119 = por %p117, %p118
      %p120 = scmp.ne.s32.totalorder %s112, %s114
      %p121 = scmp.eq.s32.totalorder %s20, 1
      %p122 = por %p120, %p121
      %p123 = scmp.ne.s32.totalorder %s114, %s115
      %p124 = scmp.eq.s32.totalorder %s20, 0
      %p125 = por %p123, %p124
      %p126 = scmp.ne.s32.totalorder %s114, %s115
      %p127 = scmp.eq.s32.totalorder %s21, 1
      %p128 = por %p126, %p127
      %p130 = scmp.ne.s32.totalorder %s115, %s129
      %p131 = scmp.eq.s32.totalorder %s21, 0
      %p132 = por %p130, %p131
      %s134 = sadd.s32 %s133, 1
      %p137 = scmp.eq.s32.totalorder %s15, 1
      %p138 = scmp.ne.s32.totalorder %s133, %s135
      %p139 = scmp.eq.s32.totalorder %s15, 0
      %p140 = por %p138, %p139
      %p141 = scmp.ne.s32.totalorder %s133, %s135
      %p142 = scmp.eq.s32.totalorder %s20, 1
      %p143 = por %p141, %p142
      %p144 = scmp.ne.s32.totalorder %s135, %s136
      %p145 = scmp.eq.s32.totalorder %s20, 0
      %p146 = por %p144, %p145
      %p147 = scmp.ne.s32.totalorder %s135, %s136
      %p148 = scmp.eq.s32.totalorder %s21, 1
      %p149 = por %p147, %p148
      %p151 = scmp.ne.s32.totalorder %s136, %s150
      %p152 = scmp.eq.s32.totalorder %s21, 0
      %p153 = por %p151, %p152
      %s154 = ssub.s32 %s15, %s22
      %p155 = scmp.eq.s32.totalorder %s154, 0
      %s157 = sadd.s32 %s156, 1
      %s158 = scalar_select %p155, %s156, %s157
      %p161 = pneg %p155
      %p162 = scmp.eq.s32.totalorder %s15, 1
      %p163 = por %p161, %p162
      %p164 = scmp.ne.s32.totalorder %s156, %s159
      %p165 = scmp.eq.s32.totalorder %s15, 0
      %p166 = por %p164, %p165
      %p167 = scmp.ne.s32.totalorder %s156, %s159
      %p168 = scmp.eq.s32.totalorder %s20, 1
      %p169 = por %p167, %p168
      %p170 = scmp.ne.s32.totalorder %s159, %s160
      %p171 = scmp.eq.s32.totalorder %s20, 0
      %p172 = por %p170, %p171
      %p173 = scmp.ne.s32.totalorder %s159, %s160
      %p174 = scmp.eq.s32.totalorder %s21, 1
      %p175 = por %p173, %p174
      %p177 = scmp.ne.s32.totalorder %s160, %s176
      %p178 = scmp.eq.s32.totalorder %s21, 0
      %p179 = por %p177, %p178
      %p180 = scmp.le.s32.totalorder 1, %s15
      %p181 = scmp.lt.s32.totalorder %s15, 3
      %p182 = pnand %p180, %p181
      %p183 = pneg %p182
      // Predicated region
      $region9: #{attention.1} parent=5 // pred_check
        _
      $region10: #{attention.1} parent=5 // pred_check_branch
        %185 = sbr.rel (%p182) target = $region12
      $region11: #{attention.1} parent=5 // pred_region
        %s186 = ssub.s32 %s15, 1
        // Predicated region
        $region13: #{attention.1} parent=11 // pred_check
          %p187 = pneg %p62
        $region14: #{attention.1} parent=11 // pred_check_branch
          %189 = sbr.rel (%p187) target = $region16
        $region15: #{attention.1} parent=11 // pred_region
          _
        $region16: #{attention.1} parent=11 // pred_fallthru
          _
        // Predicated region
        $region17: #{attention.1} parent=11 // pred_check
          %p190 = pneg %p83
        $region18: #{attention.1} parent=11 // pred_check_branch
          %192 = sbr.rel (%p190) target = $region20
        $region19: #{attention.1} parent=11 // pred_region
          _
        $region20: #{attention.1} parent=11 // pred_fallthru
          _
        // Predicated region
        $region21: #{attention.1} parent=11 // pred_check
          %p193 = pneg %p104
        $region22: #{attention.1} parent=11 // pred_check_branch
          %195 = sbr.rel (%p193) target = $region24
        $region23: #{attention.1} parent=11 // pred_region
          _
        $region24: #{attention.1} parent=11 // pred_fallthru
          _
        // Predicated region
        $region25: #{attention.1} parent=11 // pred_check
          %p196 = pneg %p125
        $region26: #{attention.1} parent=11 // pred_check_branch
          %198 = sbr.rel (%p196) target = $region28
        $region27: #{attention.1} parent=11 // pred_region
          _
        $region28: #{attention.1} parent=11 // pred_fallthru
          _
        // Predicated region
        $region29: #{attention.1} parent=11 // pred_check
          %p199 = pneg %p146
        $region30: #{attention.1} parent=11 // pred_check_branch
          %201 = sbr.rel (%p199) target = $region32
        $region31: #{attention.1} parent=11 // pred_region
          _
        $region32: #{attention.1} parent=11 // pred_fallthru
          _
      $region12: #{attention.1} parent=5 // pred_fallthru
        _
      %p202 = scmp.lt.s32.totalorder %s15, 2
      // Predicated region
      $region33: #{attention.1} parent=5 // pred_check
        %p203 = pneg %p202
      $region34: #{attention.1} parent=5 // pred_check_branch
        %205 = sbr.rel (%p203) target = $region36
      $region35: #{attention.1} parent=5 // pred_region
        // Predicated region
        $region37: #{attention.1} parent=35 // pred_check
          %p206 = pneg %p35
        $region38: #{attention.1} parent=35 // pred_check_branch
          %208 = sbr.rel (%p206) target = $region40
        $region39: #{attention.1} parent=35 // pred_region
          %p209 = scmp.lt.s32.totalorder %s15, 1
          %s210 = scalar_select %p209, %s15, 1
          %s211 = smul.addr %s210, 8
          %s212 = scalar_lea.vmem %s0, %s211
        $region40: #{attention.1} parent=35 // pred_fallthru
          _
      $region36: #{attention.1} parent=5 // pred_fallthru
        _
      %p213 = scmp.le.s32.totalorder 1, %s15
      %p214 = scmp.lt.s32.totalorder %s15, 3
      %p215 = pnand %p213, %p214
      %p216 = pneg %p215
      // Predicated region
      $region41: #{attention.1} parent=5 // pred_check
        _
      $region42: #{attention.1} parent=5 // pred_check_branch
        %218 = sbr.rel (%p215) target = $region44
      $region43: #{attention.1} parent=5 // pred_region
        %s219 = ssub.s32 %s15, 1
        %p220 = scmp.lt.s32.totalorder %s20, 1
        %s221 = scalar_select %p220, %s20, 1
        %s222 = smul.addr %s221, 8
        %s223 = scalar_lea.vmem %s0, %s222
        %p224 = pneg %p41
        %p225 = pneg %p38
        %p226 = pneg %p62
        %p227 = pneg %p59
        %p228 = pneg %p83
        %p229 = pneg %p80
        %p230 = pneg %p104
        %p231 = pneg %p101
        %p232 = pneg %p125
        %p233 = pneg %p122
        %p234 = pneg %p146
        %p235 = pneg %p143
        %p236 = pneg %p172
        %p237 = pneg %p169
        %s238 = sand.u32 %s159, 1
        %s239 = scalar_lea.sflag [#allocation5], %s238
        %s240 = sand.u32 %s159, 1
        %s241 = smul.addr %s240, 8
        %s242 = scalar_lea.vmem [#allocation4], %s241
        %p243 = scmp.lt.s32.totalorder %s20, 1
        %s244 = scalar_select %p243, %s20, 1
        %s245 = smul.addr %s244, 8
        %s246 = scalar_lea.vmem %s0, %s245
        %v247 = vld [vmem:[%s246] sm:$0xff]
        %vm248 = vcmask 261120
        %v249 = vsel %vm248, %v247, 0.0
        %250 = vadd.xlane.f32.xlu0 %v249
        %v251 = vpop.xlane.xlu0 %250
        %v252 = vrcp.pop 32.0
        %v253 = vmul.f32 %v251, %v252
        %v254 = vsub.f32 %v247, %v253
        %v255 = vmul.f32 %v254, %v254
        %v256 = vsel %vm248, %v255, 0.0
        %257 = vadd.xlane.f32.xlu0 %v256
        %v258 = vpop.xlane.xlu0 %257
        %v259 = vmul.f32 %v258, %v252
        %v260 = vadd.f32 %v259, 1e-05
        %v261 = vrsqrt.pop %v260
        %v262 = vmul.f32 %v254, %v261
        %v263 = vld [vmem:[%s1] sm:$0x1]
        %v265 = vlaneseq
        %v266 = vshrl.u32 %v265, 7
        %v267 = vsub.s32 0, %v266
        %v268 = vrot.slane %v263, %v267
        %v270 = vmul.f32 %v262, %v268
        %v271 = vld [vmem:[%s2] sm:$0x1]
        %v273 = vlaneseq
        %v274 = vshrl.u32 %v273, 7
        %v275 = vsub.s32 0, %v274
        %v276 = vrot.slane %v271, %v275
        %v278 = vadd.f32 %v270, %v276
        %v279 = vld [vmem:[%s3] sm:$0xff]
        %v280 = vld [vmem:[%s3 + $0x8] sm:$0xff]
        %v281 = vld [vmem:[%s3 + $0x10] sm:$0xff]
        %v282 = vld [vmem:[%s3 + $0x18] sm:$0xff]
        %v283 = vld [vmem:[%s3 + $0x20] sm:$0xff]
        %v284 = vld [vmem:[%s3 + $0x28] sm:$0xff]
        %v285 = vld [vmem:[%s3 + $0x30] sm:$0xff]
        %v286 = vld [vmem:[%s3 + $0x38] sm:$0xff]
        %v288 = vsel %vm248, %v278, 0
        %290 = vmatprep.subr.mxu0 %v280
        %291 = vmatpush1.msra.mxu0 %v279
        %292 = vmatprep.subr.mxu0 %v282
        %293 = vmatpush1.msra.mxu0 %v281
        %294 = vmatprep.subr.mxu0 %v284
        %295 = vmatpush1.msra.mxu0 %v283
        %296 = vmatprep.subr.mxu0 %v286
        %297 = vmatpush1.msra.mxu0 %v285
        %298 = vmatprep.subr.mxu0 0.0
        %299 = vmatpush1.msra.mxu0 0.0
        %300 = vmatprep.subr.mxu0 0.0
        %301 = vmatpush1.msra.mxu0 0.0
        %302 = vmatprep.subr.mxu0 0.0
        %303 = vmatpush1.msra.mxu0 0.0
        %304 = vmatprep.subr.mxu0 0.0
        %305 = vmatpush1.msra.mxu0 0.0
        %306 = vmatprep.subr.mxu0 0.0
        %307 = vmatpush1.msra.mxu0 0.0
        %308 = vmatprep.subr.mxu0 0.0
        %309 = vmatpush1.msra.mxu0 0.0
        %310 = vmatprep.subr.mxu0 0.0
        %311 = vmatpush1.msra.mxu0 0.0
        %312 = vmatprep.subr.mxu0 0.0
        %313 = vmatpush1.msra.mxu0 0.0
        %314 = vmatprep.subr.mxu0 0.0
        %315 = vmatpush1.msra.mxu0 0.0
        %316 = vmatprep.subr.mxu0 0.0
        %317 = vmatpush1.msra.mxu0 0.0
        %318 = vmatprep.subr.mxu0 0.0
        %319 = vmatpush1.msra.mxu0 0.0
        %320 = vmatprep.subr.mxu0 0.0
        %321 = vmatpush1.msra.mxu0 0.0
        %322 = vmatprep.subr.mxu0 0.0
        %323 = vmatpush1.msra.mxu0 0.0
        %324 = vmatprep.subr.mxu0 0.0
        %325 = vmatpush1.msra.mxu0 0.0
        %326 = vmatprep.subr.mxu0 0.0
        %327 = vmatpush1.msra.mxu0 0.0
        %328 = vmatprep.subr.mxu0 0.0
        %329 = vmatpush1.msra.mxu0 0.0
        %330 = vmatprep.subr.mxu0 0.0
        %331 = vmatpush1.msra.mxu0 0.0
        %332 = vmatprep.subr.mxu0 0.0
        %333 = vmatpush1.msra.mxu0 0.0
        %334 = vmatprep.subr.mxu0 0.0
        %335 = vmatpush1.msra.mxu0 0.0
        %336 = vmatprep.subr.mxu0 0.0
        %337 = vmatpush1.msra.mxu0 0.0
        %338 = vmatprep.subr.mxu0 0.0
        %339 = vmatpush1.msra.mxu0 0.0
        %340 = vmatprep.subr.mxu0 0.0
        %341 = vmatpush1.msra.mxu0 0.0
        %342 = vmatprep.subr.mxu0 0.0
        %343 = vmatpush1.msra.mxu0 0.0
        %344 = vmatprep.subr.mxu0 0.0
        %345 = vmatpush1.msra.mxu0 0.0
        %346 = vmatprep.subr.mxu0 0.0
        %347 = vmatpush1.msra.mxu0 0.0
        %348 = vmatprep.subr.mxu0 0.0
        %349 = vmatpush1.msra.mxu0 0.0
        %350 = vmatprep.subr.mxu0 0.0
        %351 = vmatpush1.msra.mxu0 0.0
        %352 = vmatprep.subr.mxu0 0.0
        %353 = vmatpush1.msra.mxu0 0.0
        %354 = vmatprep.mubr.f32.mxu0 0.0
        %355 = vmatmul.mubr.f32.gmra.mrb[0].mxu0 %v288
        %v356 = vpop.f32.mrb[0].mxu0
        %v357 = vadd.f32 0.0, %v356
        %v358 = vpop.f32.mrb[0].mxu0
        %v359 = vadd.f32 0.0, %v358
        %360 = vdwg.mxu0
        %361 = vst [vmem:[#allocation2] sm:$0xff] %v357
        %vm362 = vcmask 523264
        %363 = vst.msk [vmem:[#allocation2 + $0x8] sm:$0xff] %vm362, %v359
        %v364 = vld [vmem:[#allocation2] sm:$0xff]
        %v365 = vld [vmem:[#allocation2 + $0x8] sm:$0xff]
        %367 = vrot.lane.b32.xlu0 %v364, 64
        %v368 = vpop.permute.xlu0 %367
        %vm369 = vcmask 130048
        %v370 = vsel %vm369, %v364, 0
        %v372 = vsel %vm369, %v368, 0
        %374 = vmatprep.subr.mxu0 0.0
        %375 = vmatpush1.xpose.msra.mxu0 %v372
        %376 = vmatprep.subr.mxu0 0.0
        %377 = vmatpush1.xpose.msra.mxu0 0.0
        %378 = vmatprep.subr.mxu0 0.0
        %379 = vmatpush1.xpose.msra.mxu0 0.0
        %380 = vmatprep.subr.mxu0 0.0
        %381 = vmatpush1.xpose.msra.mxu0 0.0
        %382 = vmatprep.subr.mxu0 0.0
        %383 = vmatpush1.xpose.msra.mxu0 0.0
        %384 = vmatprep.subr.mxu0 0.0
        %385 = vmatpush1.xpose.msra.mxu0 0.0
        %386 = vmatprep.subr.mxu0 0.0
        %387 = vmatpush1.xpose.msra.mxu0 0.0
        %388 = vmatprep.subr.mxu0 0.0
        %389 = vmatpush1.xpose.msra.mxu0 0.0
        %390 = vmatprep.subr.mxu0 0.0
        %391 = vmatpush1.xpose.msra.mxu0 0.0
        %392 = vmatprep.subr.mxu0 0.0
        %393 = vmatpush1.xpose.msra.mxu0 0.0
        %394 = vmatprep.subr.mxu0 0.0
        %395 = vmatpush1.xpose.msra.mxu0 0.0
        %396 = vmatprep.subr.mxu0 0.0
        %397 = vmatpush1.xpose.msra.mxu0 0.0
        %398 = vmatprep.subr.mxu0 0.0
        %399 = vmatpush1.xpose.msra.mxu0 0.0
        %400 = vmatprep.subr.mxu0 0.0
        %401 = vmatpush1.xpose.msra.mxu0 0.0
        %402 = vmatprep.subr.mxu0 0.0
        %403 = vmatpush1.xpose.msra.mxu0 0.0
        %404 = vmatprep.subr.mxu0 0.0
        %405 = vmatpush1.xpose.msra.mxu0 0.0
        %406 = vmatprep.subr.mxu0 0.0
        %407 = vmatpush1.xpose.msra.mxu0 0.0
        %408 = vmatprep.subr.mxu0 0.0
        %409 = vmatpush1.xpose.msra.mxu0 0.0
        %410 = vmatprep.subr.mxu0 0.0
        %411 = vmatpush1.xpose.msra.mxu0 0.0
        %412 = vmatprep.subr.mxu0 0.0
        %413 = vmatpush1.xpose.msra.mxu0 0.0
        %414 = vmatprep.subr.mxu0 0.0
        %415 = vmatpush1.xpose.msra.mxu0 0.0
        %416 = vmatprep.subr.mxu0 0.0
        %417 = vmatpush1.xpose.msra.mxu0 0.0
        %418 = vmatprep.subr.mxu0 0.0
        %419 = vmatpush1.xpose.msra.mxu0 0.0
        %420 = vmatprep.subr.mxu0 0.0
        %421 = vmatpush1.xpose.msra.mxu0 0.0
        %422 = vmatprep.subr.mxu0 0.0
        %423 = vmatpush1.xpose.msra.mxu0 0.0
        %424 = vmatprep.subr.mxu0 0.0
        %425 = vmatpush1.xpose.msra.mxu0 0.0
        %426 = vmatprep.subr.mxu0 0.0
        %427 = vmatpush1.xpose.msra.mxu0 0.0
        %428 = vmatprep.subr.mxu0 0.0
        %429 = vmatpush1.xpose.msra.mxu0 0.0
        %430 = vmatprep.subr.mxu0 0.0
        %431 = vmatpush1.xpose.msra.mxu0 0.0
        %432 = vmatprep.subr.mxu0 0.0
        %433 = vmatpush1.xpose.msra.mxu0 0.0
        %434 = vmatprep.subr.mxu0 0.0
        %435 = vmatpush1.xpose.msra.mxu0 0.0
        %436 = vmatprep.subr.mxu0 0.0
        %437 = vmatpush1.xpose.msra.mxu0 0.0
        %438 = vmatprep.mubr.f32.mxu0 0.0
        %439 = vmatmul.mubr.f32.gmra.mrb[0].mxu0 %v370
        %v440 = vpop.f32.mrb[0].mxu0
        %v441 = vadd.f32 0.0, %v440
        %v442 = vpop.f32.mrb[0].mxu0
        %443 = vdwg.mxu0
        %vm444 = vcmask 64512
        %v445 = vsel %vm444, %v441, -inf
        %446 = vmax.xlane.f32.xlu0 %v445
        %v447 = vpop.xlane.xlu0 %446
        %v448 = vsub.f32 %v441, %v447
        %v449 = vmul.f32 %v448, 1.442695
        %v450 = vpow.pop %v449
        %v451 = vsel %vm444, %v450, 0.0
        %452 = vadd.xlane.f32.xlu0 %v451
        %v453 = vpop.xlane.xlu0 %452
        %v455 = vsel %vm444, %v450, 0
        %457 = vmatprep.subr.mxu0 0.0
        %458 = vmatpush1.msra.mxu0 %v365
        %459 = vmatprep.subr.mxu0 0.0
        %460 = vmatpush1.msra.mxu0 0.0
        %461 = vmatprep.subr.mxu0 0.0
        %462 = vmatpush1.msra.mxu0 0.0
        %463 = vmatprep.subr.mxu0 0.0
        %464 = vmatpush1.msra.mxu0 0.0
        %465 = vmatprep.subr.mxu0 0.0
        %466 = vmatpush1.msra.mxu0 0.0
        %467 = vmatprep.subr.mxu0 0.0
        %468 = vmatpush1.msra.mxu0 0.0
        %469 = vmatprep.subr.mxu0 0.0
        %470 = vmatpush1.msra.mxu0 0.0
        %471 = vmatprep.subr.mxu0 0.0
        %472 = vmatpush1.msra.mxu0 0.0
        %473 = vmatprep.subr.mxu0 0.0
        %474 = vmatpush1.msra.mxu0 0.0
        %475 = vmatprep.subr.mxu0 0.0
        %476 = vmatpush1.msra.mxu0 0.0
        %477 = vmatprep.subr.mxu0 0.0
        %478 = vmatpush1.msra.mxu0 0.0
        %479 = vmatprep.subr.mxu0 0.0
        %480 = vmatpush1.msra.mxu0 0.0
        %481 = vmatprep.subr.mxu0 0.0
        %482 = vmatpush1.msra.mxu0 0.0
        %483 = vmatprep.subr.mxu0 0.0
        %484 = vmatpush1.msra.mxu0 0.0
        %485 = vmatprep.subr.mxu0 0.0
        %486 = vmatpush1.msra.mxu0 0.0
        %487 = vmatprep.subr.mxu0 0.0
        %488 = vmatpush1.msra.mxu0 0.0
        %489 = vmatprep.subr.mxu0 0.0
        %490 = vmatpush1.msra.mxu0 0.0
        %491 = vmatprep.subr.mxu0 0.0
        %492 = vmatpush1.msra.mxu0 0.0
        %493 = vmatprep.subr.mxu0 0.0
        %494 = vmatpush1.msra.mxu0 0.0
        %495 = vmatprep.subr.mxu0 0.0
        %496 = vmatpush1.msra.mxu0 0.0
        %497 = vmatprep.subr.mxu0 0.0
        %498 = vmatpush1.msra.mxu0 0.0
        %499 = vmatprep.subr.mxu0 0.0
        %500 = vmatpush1.msra.mxu0 0.0
        %501 = vmatprep.subr.mxu0 0.0
        %502 = vmatpush1.msra.mxu0 0.0
        %503 = vmatprep.subr.mxu0 0.0
        %504 = vmatpush1.msra.mxu0 0.0
        %505 = vmatprep.subr.mxu0 0.0
        %506 = vmatpush1.msra.mxu0 0.0
        %507 = vmatprep.subr.mxu0 0.0
        %508 = vmatpush1.msra.mxu0 0.0
        %509 = vmatprep.subr.mxu0 0.0
        %510 = vmatpush1.msra.mxu0 0.0
        %511 = vmatprep.subr.mxu0 0.0
        %512 = vmatpush1.msra.mxu0 0.0
        %513 = vmatprep.subr.mxu0 0.0
        %514 = vmatpush1.msra.mxu0 0.0
        %515 = vmatprep.subr.mxu0 0.0
        %516 = vmatpush1.msra.mxu0 0.0
        %517 = vmatprep.subr.mxu0 0.0
        %518 = vmatpush1.msra.mxu0 0.0
        %519 = vmatprep.subr.mxu0 0.0
        %520 = vmatpush1.msra.mxu0 0.0
        %521 = vmatprep.mubr.f32.mxu0 0.0
        %522 = vmatmul.mubr.f32.gmra.mrb[0].mxu0 %v455
        %v523 = vpop.f32.mrb[0].mxu0
        %v524 = vadd.f32 0.0, %v523
        %v525 = vpop.f32.mrb[0].mxu0
        %526 = vdwg.mxu0
        %v527 = vrcp.pop %v453
        %v528 = vmul.f32 %v524, %v527
        %529 = vst.msk [vmem:[#allocation3] sm:$0xff] %vm369, %v528
        %v530 = vld [vmem:[#allocation2] sm:$0xff]
        %v531 = vld [vmem:[#allocation2 + $0x8] sm:$0xff]
        %533 = vrot.lane.b32.xlu0 %v530, 112
        %v534 = vpop.permute.xlu0 %533
        %535 = vrot.lane.b32.xlu0 %v530, 48
        %v536 = vpop.permute.xlu0 %535
        %v537 = vsel %vm369, %v534, 0
        %v539 = vsel %vm369, %v536, 0
        %541 = vmatprep.subr.mxu0 0.0
        %542 = vmatpush1.xpose.msra.mxu0 %v539
        %543 = vmatprep.subr.mxu0 0.0
        %544 = vmatpush1.xpose.msra.mxu0 0.0
        %545 = vmatprep.subr.mxu0 0.0
        %546 = vmatpush1.xpose.msra.mxu0 0.0
        %547 = vmatprep.subr.mxu0 0.0
        %548 = vmatpush1.xpose.msra.mxu0 0.0
        %549 = vmatprep.subr.mxu0 0.0
        %550 = vmatpush1.xpose.msra.mxu0 0.0
        %551 = vmatprep.subr.mxu0 0.0
        %552 = vmatpush1.xpose.msra.mxu0 0.0
        %553 = vmatprep.subr.mxu0 0.0
        %554 = vmatpush1.xpose.msra.mxu0 0.0
        %555 = vmatprep.subr.mxu0 0.0
        %556 = vmatpush1.xpose.msra.mxu0 0.0
        %557 = vmatprep.subr.mxu0 0.0
        %558 = vmatpush1.xpose.msra.mxu0 0.0
        %559 = vmatprep.subr.mxu0 0.0
        %560 = vmatpush1.xpose.msra.mxu0 0.0
        %561 = vmatprep.subr.mxu0 0.0
        %562 = vmatpush1.xpose.msra.mxu0 0.0
        %563 = vmatprep.subr.mxu0 0.0
        %564 = vmatpush1.xpose.msra.mxu0 0.0
        %565 = vmatprep.subr.mxu0 0.0
        %566 = vmatpush1.xpose.msra.mxu0 0.0
        %567 = vmatprep.subr.mxu0 0.0
        %568 = vmatpush1.xpose.msra.mxu0 0.0
        %569 = vmatprep.subr.mxu0 0.0
        %570 = vmatpush1.xpose.msra.mxu0 0.0
        %571 = vmatprep.subr.mxu0 0.0
        %572 = vmatpush1.xpose.msra.mxu0 0.0
        %573 = vmatprep.subr.mxu0 0.0
        %574 = vmatpush1.xpose.msra.mxu0 0.0
        %575 = vmatprep.subr.mxu0 0.0
        %576 = vmatpush1.xpose.msra.mxu0 0.0
        %577 = vmatprep.subr.mxu0 0.0
        %578 = vmatpush1.xpose.msra.mxu0 0.0
        %579 = vmatprep.subr.mxu0 0.0
        %580 = vmatpush1.xpose.msra.mxu0 0.0
        %581 = vmatprep.subr.mxu0 0.0
        %582 = vmatpush1.xpose.msra.mxu0 0.0
        %583 = vmatprep.subr.mxu0 0.0
        %584 = vmatpush1.xpose.msra.mxu0 0.0
        %585 = vmatprep.subr.mxu0 0.0
        %586 = vmatpush1.xpose.msra.mxu0 0.0
        %587 = vmatprep.subr.mxu0 0.0
        %588 = vmatpush1.xpose.msra.mxu0 0.0
        %589 = vmatprep.subr.mxu0 0.0
        %590 = vmatpush1.xpose.msra.mxu0 0.0
        %591 = vmatprep.subr.mxu0 0.0
        %592 = vmatpush1.xpose.msra.mxu0 0.0
        %593 = vmatprep.subr.mxu0 0.0
        %594 = vmatpush1.xpose.msra.mxu0 0.0
        %595 = vmatprep.subr.mxu0 0.0
        %596 = vmatpush1.xpose.msra.mxu0 0.0
        %597 = vmatprep.subr.mxu0 0.0
        %598 = vmatpush1.xpose.msra.mxu0 0.0
        %599 = vmatprep.subr.mxu0 0.0
        %600 = vmatpush1.xpose.msra.mxu0 0.0
        %601 = vmatprep.subr.mxu0 0.0
        %602 = vmatpush1.xpose.msra.mxu0 0.0
        %603 = vmatprep.subr.mxu0 0.0
        %604 = vmatpush1.xpose.msra.mxu0 0.0
        %605 = vmatprep.mubr.f32.mxu0 0.0
        %606 = vmatmul.mubr.f32.gmra.mrb[0].mxu0 %v537
        %v607 = vpop.f32.mrb[0].mxu0
        %v608 = vadd.f32 0.0, %v607
        %v609 = vpop.f32.mrb[0].mxu0
        %610 = vdwg.mxu0
        %v611 = vsel %vm444, %v608, -inf
        %612 = vmax.xlane.f32.xlu0 %v611
        %v613 = vpop.xlane.xlu0 %612
        %v614 = vsub.f32 %v608, %v613
        %v615 = vmul.f32 %v614, 1.442695
        %v616 = vpow.pop %v615
        %v617 = vsel %vm444, %v616, 0.0
        %618 = vadd.xlane.f32.xlu0 %v617
        %v619 = vpop.xlane.xlu0 %618
        %621 = vrot.lane.b32.xlu0 %v531, 112
        %v622 = vpop.permute.xlu0 %621
        %v625 = vsel %vm444, %v616, 0
        %627 = vmatprep.subr.mxu0 0.0
        %628 = vmatpush1.msra.mxu0 %v622
        %629 = vmatprep.subr.mxu0 0.0
        %630 = vmatpush1.msra.mxu0 0.0
        %631 = vmatprep.subr.mxu0 0.0
        %632 = vmatpush1.msra.mxu0 0.0
        %633 = vmatprep.subr.mxu0 0.0
        %634 = vmatpush1.msra.mxu0 0.0
        %635 = vmatprep.subr.mxu0 0.0
        %636 = vmatpush1.msra.mxu0 0.0
        %637 = vmatprep.subr.mxu0 0.0
        %638 = vmatpush1.msra.mxu0 0.0
        %639 = vmatprep.subr.mxu0 0.0
        %640 = vmatpush1.msra.mxu0 0.0
        %641 = vmatprep.subr.mxu0 0.0
        %642 = vmatpush1.msra.mxu0 0.0
        %643 = vmatprep.subr.mxu0 0.0
        %644 = vmatpush1.msra.mxu0 0.0
        %645 = vmatprep.subr.mxu0 0.0
        %646 = vmatpush1.msra.mxu0 0.0
        %647 = vmatprep.subr.mxu0 0.0
        %648 = vmatpush1.msra.mxu0 0.0
        %649 = vmatprep.subr.mxu0 0.0
        %650 = vmatpush1.msra.mxu0 0.0
        %651 = vmatprep.subr.mxu0 0.0
        %652 = vmatpush1.msra.mxu0 0.0
        %653 = vmatprep.subr.mxu0 0.0
        %654 = vmatpush1.msra.mxu0 0.0
        %655 = vmatprep.subr.mxu0 0.0
        %656 = vmatpush1.msra.mxu0 0.0
        %657 = vmatprep.subr.mxu0 0.0
        %658 = vmatpush1.msra.mxu0 0.0
        %659 = vmatprep.subr.mxu0 0.0
        %660 = vmatpush1.msra.mxu0 0.0
        %661 = vmatprep.subr.mxu0 0.0
        %662 = vmatpush1.msra.mxu0 0.0
        %663 = vmatprep.subr.mxu0 0.0
        %664 = vmatpush1.msra.mxu0 0.0
        %665 = vmatprep.subr.mxu0 0.0
        %666 = vmatpush1.msra.mxu0 0.0
        %667 = vmatprep.subr.mxu0 0.0
        %668 = vmatpush1.msra.mxu0 0.0
        %669 = vmatprep.subr.mxu0 0.0
        %670 = vmatpush1.msra.mxu0 0.0
        %671 = vmatprep.subr.mxu0 0.0
        %672 = vmatpush1.msra.mxu0 0.0
        %673 = vmatprep.subr.mxu0 0.0
        %674 = vmatpush1.msra.mxu0 0.0
        %675 = vmatprep.subr.mxu0 0.0
        %676 = vmatpush1.msra.mxu0 0.0
        %677 = vmatprep.subr.mxu0 0.0
        %678 = vmatpush1.msra.mxu0 0.0
        %679 = vmatprep.subr.mxu0 0.0
        %680 = vmatpush1.msra.mxu0 0.0
        %681 = vmatprep.subr.mxu0 0.0
        %682 = vmatpush1.msra.mxu0 0.0
        %683 = vmatprep.subr.mxu0 0.0
        %684 = vmatpush1.msra.mxu0 0.0
        %685 = vmatprep.subr.mxu0 0.0
        %686 = vmatpush1.msra.mxu0 0.0
        %687 = vmatprep.subr.mxu0 0.0
        %688 = vmatpush1.msra.mxu0 0.0
        %689 = vmatprep.subr.mxu0 0.0
        %690 = vmatpush1.msra.mxu0 0.0
        %691 = vmatprep.mubr.f32.mxu0 0.0
        %692 = vmatmul.mubr.f32.gmra.mrb[0].mxu0 %v625
        %v693 = vpop.f32.mrb[0].mxu0
        %v694 = vadd.f32 0.0, %v693
        %v695 = vpop.f32.mrb[0].mxu0
        %696 = vdwg.mxu0
        %v697 = vrcp.pop %v619
        %v698 = vmul.f32 %v694, %v697
        %700 = vrot.lane.b32.xlu0 %v698, 16
        %v701 = vpop.permute.xlu0 %700
        %vm703 = vcmask 261248
        %704 = vst.msk [vmem:[#allocation3] sm:$0xff] %vm703, %v701
        %v705 = vld [vmem:[#allocation2] sm:$0xff]
        %v706 = vld [vmem:[#allocation2 + $0x8] sm:$0xff]
        %708 = vrot.lane.b32.xlu0 %v705, 96
        %v709 = vpop.permute.xlu0 %708
        %710 = vrot.lane.b32.xlu0 %v705, 32
        %v711 = vpop.permute.xlu0 %710
        %v712 = vsel %vm369, %v709, 0
        %v714 = vsel %vm369, %v711, 0
        %716 = vmatprep.subr.mxu0 0.0
        %717 = vmatpush1.xpose.msra.mxu0 %v714
        %718 = vmatprep.subr.mxu0 0.0
        %719 = vmatpush1.xpose.msra.mxu0 0.0
        %720 = vmatprep.subr.mxu0 0.0
        %721 = vmatpush1.xpose.msra.mxu0 0.0
        %722 = vmatprep.subr.mxu0 0.0
        %723 = vmatpush1.xpose.msra.mxu0 0.0
        %724 = vmatprep.subr.mxu0 0.0
        %725 = vmatpush1.xpose.msra.mxu0 0.0
        %726 = vmatprep.subr.mxu0 0.0
        %727 = vmatpush1.xpose.msra.mxu0 0.0
        %728 = vmatprep.subr.mxu0 0.0
        %729 = vmatpush1.xpose.msra.mxu0 0.0
        %730 = vmatprep.subr.mxu0 0.0
        %731 = vmatpush1.xpose.msra.mxu0 0.0
        %732 = vmatprep.subr.mxu0 0.0
        %733 = vmatpush1.xpose.msra.mxu0 0.0
        %734 = vmatprep.subr.mxu0 0.0
        %735 = vmatpush1.xpose.msra.mxu0 0.0
        %736 = vmatprep.subr.mxu0 0.0
        %737 = vmatpush1.xpose.msra.mxu0 0.0
        %738 = vmatprep.subr.mxu0 0.0
        %739 = vmatpush1.xpose.msra.mxu0 0.0
        %740 = vmatprep.subr.mxu0 0.0
        %741 = vmatpush1.xpose.msra.mxu0 0.0
        %742 = vmatprep.subr.mxu0 0.0
        %743 = vmatpush1.xpose.msra.mxu0 0.0
        %744 = vmatprep.subr.mxu0 0.0
        %745 = vmatpush1.xpose.msra.mxu0 0.0
        %746 = vmatprep.subr.mxu0 0.0
        %747 = vmatpush1.xpose.msra.mxu0 0.0
        %748 = vmatprep.subr.mxu0 0.0
        %749 = vmatpush1.xpose.msra.mxu0 0.0
        %750 = vmatprep.subr.mxu0 0.0
        %751 = vmatpush1.xpose.msra.mxu0 0.0
        %752 = vmatprep.subr.mxu0 0.0
        %753 = vmatpush1.xpose.msra.mxu0 0.0
        %754 = vmatprep.subr.mxu0 0.0
        %755 = vmatpush1.xpose.msra.mxu0 0.0
        %756 = vmatprep.subr.mxu0 0.0
        %757 = vmatpush1.xpose.msra.mxu0 0.0
        %758 = vmatprep.subr.mxu0 0.0
        %759 = vmatpush1.xpose.msra.mxu0 0.0
        %760 = vmatprep.subr.mxu0 0.0
        %761 = vmatpush1.xpose.msra.mxu0 0.0
        %762 = vmatprep.subr.mxu0 0.0
        %763 = vmatpush1.xpose.msra.mxu0 0.0
        %764 = vmatprep.subr.mxu0 0.0
        %765 = vmatpush1.xpose.msra.mxu0 0.0
        %766 = vmatprep.subr.mxu0 0.0
        %767 = vmatpush1.xpose.msra.mxu0 0.0
        %768 = vmatprep.subr.mxu0 0.0
        %769 = vmatpush1.xpose.msra.mxu0 0.0
        %770 = vmatprep.subr.mxu0 0.0
        %771 = vmatpush1.xpose.msra.mxu0 0.0
        %772 = vmatprep.subr.mxu0 0.0
        %773 = vmatpush1.xpose.msra.mxu0 0.0
        %774 = vmatprep.subr.mxu0 0.0
        %775 = vmatpush1.xpose.msra.mxu0 0.0
        %776 = vmatprep.subr.mxu0 0.0
        %777 = vmatpush1.xpose.msra.mxu0 0.0
        %778 = vmatprep.subr.mxu0 0.0
        %779 = vmatpush1.xpose.msra.mxu0 0.0
        %780 = vmatprep.mubr.f32.mxu0 0.0
        %781 = vmatmul.mubr.f32.gmra.mrb[0].mxu0 %v712
        %v782 = vpop.f32.mrb[0].mxu0
        %v783 = vadd.f32 0.0, %v782
        %v784 = vpop.f32.mrb[0].mxu0
        %785 = vdwg.mxu0
        %v786 = vsel %vm444, %v783, -inf
        %787 = vmax.xlane.f32.xlu0 %v786
        %v788 = vpop.xlane.xlu0 %787
        %v789 = vsub.f32 %v783, %v788
        %v790 = vmul.f32 %v789, 1.442695
        %v791 = vpow.pop %v790
        %v792 = vsel %vm444, %v791, 0.0
        %793 = vadd.xlane.f32.xlu0 %v792
        %v794 = vpop.xlane.xlu0 %793
        %796 = vrot.lane.b32.xlu0 %v706, 96
        %v797 = vpop.permute.xlu0 %796
        %v800 = vsel %vm444, %v791, 0
        %802 = vmatprep.subr.mxu0 0.0
        %803 = vmatpush1.msra.mxu0 %v797
        %804 = vmatprep.subr.mxu0 0.0
        %805 = vmatpush1.msra.mxu0 0.0
        %806 = vmatprep.subr.mxu0 0.0
        %807 = vmatpush1.msra.mxu0 0.0
        %808 = vmatprep.subr.mxu0 0.0
        %809 = vmatpush1.msra.mxu0 0.0
        %810 = vmatprep.subr.mxu0 0.0
        %811 = vmatpush1.msra.mxu0 0.0
        %812 = vmatprep.subr.mxu0 0.0
        %813 = vmatpush1.msra.mxu0 0.0
        %814 = vmatprep.subr.mxu0 0.0
        %815 = vmatpush1.msra.mxu0 0.0
        %816 = vmatprep.subr.mxu0 0.0
        %817 = vmatpush1.msra.mxu0 0.0
        %818 = vmatprep.subr.mxu0 0.0
        %819 = vmatpush1.msra.mxu0 0.0
        %820 = vmatprep.subr.mxu0 0.0
        %821 = vmatpush1.msra.mxu0 0.0
        %822 = vmatprep.subr.mxu0 0.0
        %823 = vmatpush1.msra.mxu0 0.0
        %824 = vmatprep.subr.mxu0 0.0
        %825 = vmatpush1.msra.mxu0 0.0
        %826 = vmatprep.subr.mxu0 0.0
        %827 = vmatpush1.msra.mxu0 0.0
        %828 = vmatprep.subr.mxu0 0.0
        %829 = vmatpush1.msra.mxu0 0.0
        %830 = vmatprep.subr.mxu0 0.0
        %831 = vmatpush1.msra.mxu0 0.0
        %832 = vmatprep.subr.mxu0 0.0
        %833 = vmatpush1.msra.mxu0 0.0
        %834 = vmatprep.subr.mxu0 0.0
        %835 = vmatpush1.msra.mxu0 0.0
        %836 = vmatprep.subr.mxu0 0.0
        %837 = vmatpush1.msra.mxu0 0.0
        %838 = vmatprep.subr.mxu0 0.0
        %839 = vmatpush1.msra.mxu0 0.0
        %840 = vmatprep.subr.mxu0 0.0
        %841 = vmatpush1.msra.mxu0 0.0
        %842 = vmatprep.subr.mxu0 0.0
        %843 = vmatpush1.msra.mxu0 0.0
        %844 = vmatprep.subr.mxu0 0.0
        %845 = vmatpush1.msra.mxu0 0.0
        %846 = vmatprep.subr.mxu0 0.0
        %847 = vmatpush1.msra.mxu0 0.0
        %848 = vmatprep.subr.mxu0 0.0
        %849 = vmatpush1.msra.mxu0 0.0
        %850 = vmatprep.subr.mxu0 0.0
        %851 = vmatpush1.msra.mxu0 0.0
        %852 = vmatprep.subr.mxu0 0.0
        %853 = vmatpush1.msra.mxu0 0.0
        %854 = vmatprep.subr.mxu0 0.0
        %855 = vmatpush1.msra.mxu0 0.0
        %856 = vmatprep.subr.mxu0 0.0
        %857 = vmatpush1.msra.mxu0 0.0
        %858 = vmatprep.subr.mxu0 0.0
        %859 = vmatpush1.msra.mxu0 0.0
        %860 = vmatprep.subr.mxu0 0.0
        %861 = vmatpush1.msra.mxu0 0.0
        %862 = vmatprep.subr.mxu0 0.0
        %863 = vmatpush1.msra.mxu0 0.0
        %864 = vmatprep.subr.mxu0 0.0
        %865 = vmatpush1.msra.mxu0 0.0
        %866 = vmatprep.mubr.f32.mxu0 0.0
        %867 = vmatmul.mubr.f32.gmra.mrb[0].mxu0 %v800
        %v868 = vpop.f32.mrb[0].mxu0
        %v869 = vadd.f32 0.0, %v868
        %v870 = vpop.f32.mrb[0].mxu0
        %871 = vdwg.mxu0
        %v872 = vrcp.pop %v794
        %v873 = vmul.f32 %v869, %v872
        %875 = vrot.lane.b32.xlu0 %v873, 32
        %v876 = vpop.permute.xlu0 %875
        %vm878 = vcmask 392448
        %879 = vst.msk [vmem:[#allocation3] sm:$0xff] %vm878, %v876
        %v880 = vld [vmem:[#allocation2] sm:$0xff]
        %v881 = vld [vmem:[#allocation2 + $0x8] sm:$0xff]
        %883 = vrot.lane.b32.xlu0 %v880, 80
        %v884 = vpop.permute.xlu0 %883
        %885 = vrot.lane.b32.xlu0 %v880, 16
        %v886 = vpop.permute.xlu0 %885
        %v887 = vsel %vm369, %v884, 0
        %v889 = vsel %vm369, %v886, 0
        %891 = vmatprep.subr.mxu0 0.0
        %892 = vmatpush1.xpose.msra.mxu0 %v889
        %893 = vmatprep.subr.mxu0 0.0
        %894 = vmatpush1.xpose.msra.mxu0 0.0
        %895 = vmatprep.subr.mxu0 0.0
        %896 = vmatpush1.xpose.msra.mxu0 0.0
        %897 = vmatprep.subr.mxu0 0.0
        %898 = vmatpush1.xpose.msra.mxu0 0.0
        %899 = vmatprep.subr.mxu0 0.0
        %900 = vmatpush1.xpose.msra.mxu0 0.0
        %901 = vmatprep.subr.mxu0 0.0
        %902 = vmatpush1.xpose.msra.mxu0 0.0
        %903 = vmatprep.subr.mxu0 0.0
        %904 = vmatpush1.xpose.msra.mxu0 0.0
        %905 = vmatprep.subr.mxu0 0.0
        %906 = vmatpush1.xpose.msra.mxu0 0.0
        %907 = vmatprep.subr.mxu0 0.0
        %908 = vmatpush1.xpose.msra.mxu0 0.0
        %909 = vmatprep.subr.mxu0 0.0
        %910 = vmatpush1.xpose.msra.mxu0 0.0
        %911 = vmatprep.subr.mxu0 0.0
        %912 = vmatpush1.xpose.msra.mxu0 0.0
        %913 = vmatprep.subr.mxu0 0.0
        %914 = vmatpush1.xpose.msra.mxu0 0.0
        %915 = vmatprep.subr.mxu0 0.0
        %916 = vmatpush1.xpose.msra.mxu0 0.0
        %917 = vmatprep.subr.mxu0 0.0
        %918 = vmatpush1.xpose.msra.mxu0 0.0
        %919 = vmatprep.subr.mxu0 0.0
        %920 = vmatpush1.xpose.msra.mxu0 0.0
        %921 = vmatprep.subr.mxu0 0.0
        %922 = vmatpush1.xpose.msra.mxu0 0.0
        %923 = vmatprep.subr.mxu0 0.0
        %924 = vmatpush1.xpose.msra.mxu0 0.0
        %925 = vmatprep.subr.mxu0 0.0
        %926 = vmatpush1.xpose.msra.mxu0 0.0
        %927 = vmatprep.subr.mxu0 0.0
        %928 = vmatpush1.xpose.msra.mxu0 0.0
        %929 = vmatprep.subr.mxu0 0.0
        %930 = vmatpush1.xpose.msra.mxu0 0.0
        %931 = vmatprep.subr.mxu0 0.0
        %932 = vmatpush1.xpose.msra.mxu0 0.0
        %933 = vmatprep.subr.mxu0 0.0
        %934 = vmatpush1.xpose.msra.mxu0 0.0
        %935 = vmatprep.subr.mxu0 0.0
        %936 = vmatpush1.xpose.msra.mxu0 0.0
        %937 = vmatprep.subr.mxu0 0.0
        %938 = vmatpush1.xpose.msra.mxu0 0.0
        %939 = vmatprep.subr.mxu0 0.0
        %940 = vmatpush1.xpose.msra.mxu0 0.0
        %941 = vmatprep.subr.mxu0 0.0
        %942 = vmatpush1.xpose.msra.mxu0 0.0
        %943 = vmatprep.subr.mxu0 0.0
        %944 = vmatpush1.xpose.msra.mxu0 0.0
        %945 = vmatprep.subr.mxu0 0.0
        %946 = vmatpush1.xpose.msra.mxu0 0.0
        %947 = vmatprep.subr.mxu0 0.0
        %948 = vmatpush1.xpose.msra.mxu0 0.0
        %949 = vmatprep.subr.mxu0 0.0
        %950 = vmatpush1.xpose.msra.mxu0 0.0
        %951 = vmatprep.subr.mxu0 0.0
        %952 = vmatpush1.xpose.msra.mxu0 0.0
        %953 = vmatprep.subr.mxu0 0.0
        %954 = vmatpush1.xpose.msra.mxu0 0.0
        %955 = vmatprep.mubr.f32.mxu0 0.0
        %956 = vmatmul.mubr.f32.gmra.mrb[0].mxu0 %v887
        %v957 = vpop.f32.mrb[0].mxu0
        %v958 = vadd.f32 0.0, %v957
        %v959 = vpop.f32.mrb[0].mxu0
        %960 = vdwg.mxu0
        %v961 = vsel %vm444, %v958, -inf
        %962 = vmax.xlane.f32.xlu0 %v961
        %v963 = vpop.xlane.xlu0 %962
        %v964 = vsub.f32 %v958, %v963
        %v965 = vmul.f32 %v964, 1.442695
        %v966 = vpow.pop %v965
        %v967 = vsel %vm444, %v966, 0.0
        %968 = vadd.xlane.f32.xlu0 %v967
        %v969 = vpop.xlane.xlu0 %968
        %971 = vrot.lane.b32.xlu0 %v881, 80
        %v972 = vpop.permute.xlu0 %971
        %v975 = vsel %vm444, %v966, 0
        %977 = vmatprep.subr.mxu0 0.0
        %978 = vmatpush1.msra.mxu0 %v972
        %979 = vmatprep.subr.mxu0 0.0
        %980 = vmatpush1.msra.mxu0 0.0
        %981 = vmatprep.subr.mxu0 0.0
        %982 = vmatpush1.msra.mxu0 0.0
        %983 = vmatprep.subr.mxu0 0.0
        %984 = vmatpush1.msra.mxu0 0.0
        %985 = vmatprep.subr.mxu0 0.0
        %986 = vmatpush1.msra.mxu0 0.0
        %987 = vmatprep.subr.mxu0 0.0
        %988 = vmatpush1.msra.mxu0 0.0
        %989 = vmatprep.subr.mxu0 0.0
        %990 = vmatpush1.msra.mxu0 0.0
        %991 = vmatprep.subr.mxu0 0.0
        %992 = vmatpush1.msra.mxu0 0.0
        %993 = vmatprep.subr.mxu0 0.0
        %994 = vmatpush1.msra.mxu0 0.0
        %995 = vmatprep.subr.mxu0 0.0
        %996 = vmatpush1.msra.mxu0 0.0
        %997 = vmatprep.subr.mxu0 0.0
        %998 = vmatpush1.msra.mxu0 0.0
        %999 = vmatprep.subr.mxu0 0.0
        %1000 = vmatpush1.msra.mxu0 0.0
        %1001 = vmatprep.subr.mxu0 0.0
        %1002 = vmatpush1.msra.mxu0 0.0
        %1003 = vmatprep.subr.mxu0 0.0
        %1004 = vmatpush1.msra.mxu0 0.0
        %1005 = vmatprep.subr.mxu0 0.0
        %1006 = vmatpush1.msra.mxu0 0.0
        %1007 = vmatprep.subr.mxu0 0.0
        %1008 = vmatpush1.msra.mxu0 0.0
        %1009 = vmatprep.subr.mxu0 0.0
        %1010 = vmatpush1.msra.mxu0 0.0
        %1011 = vmatprep.subr.mxu0 0.0
        %1012 = vmatpush1.msra.mxu0 0.0
        %1013 = vmatprep.subr.mxu0 0.0
        %1014 = vmatpush1.msra.mxu0 0.0
        %1015 = vmatprep.subr.mxu0 0.0
        %1016 = vmatpush1.msra.mxu0 0.0
        %1017 = vmatprep.subr.mxu0 0.0
        %1018 = vmatpush1.msra.mxu0 0.0
        %1019 = vmatprep.subr.mxu0 0.0
        %1020 = vmatpush1.msra.mxu0 0.0
        %1021 = vmatprep.subr.mxu0 0.0
        %1022 = vmatpush1.msra.mxu0 0.0
        %1023 = vmatprep.subr.mxu0 0.0
        %1024 = vmatpush1.msra.mxu0 0.0
        %1025 = vmatprep.subr.mxu0 0.0
        %1026 = vmatpush1.msra.mxu0 0.0
        %1027 = vmatprep.subr.mxu0 0.0
        %1028 = vmatpush1.msra.mxu0 0.0
        %1029 = vmatprep.subr.mxu0 0.0
        %1030 = vmatpush1.msra.mxu0 0.0
        %1031 = vmatprep.subr.mxu0 0.0
        %1032 = vmatpush1.msra.mxu0 0.0
        %1033 = vmatprep.subr.mxu0 0.0
        %1034 = vmatpush1.msra.mxu0 0.0
        %1035 = vmatprep.subr.mxu0 0.0
        %1036 = vmatpush1.msra.mxu0 0.0
        %1037 = vmatprep.subr.mxu0 0.0
        %1038 = vmatpush1.msra.mxu0 0.0
        %1039 = vmatprep.subr.mxu0 0.0
        %1040 = vmatpush1.msra.mxu0 0.0
        %1041 = vmatprep.mubr.f32.mxu0 0.0
        %1042 = vmatmul.mubr.f32.gmra.mrb[0].mxu0 %v975
        %v1043 = vpop.f32.mrb[0].mxu0
        %v1044 = vadd.f32 0.0, %v1043
        %v1045 = vpop.f32.mrb[0].mxu0
        %1046 = vdwg.mxu0
        %v1047 = vrcp.pop %v969
        %v1048 = vmul.f32 %v1044, %v1047
        %1050 = vrot.lane.b32.xlu0 %v1048, 48
        %v1051 = vpop.permute.xlu0 %1050
        %vm1053 = vcmask 523648
        %1054 = vst.msk [vmem:[#allocation3] sm:$0xff] %vm1053, %v1051
        %v1055 = vld [vmem:[#allocation3] sm:$0xff]
        %v1056 = vld [vmem:[%s4] sm:$0xff]
        %v1057 = vld [vmem:[%s4 + $0x8] sm:$0xff]
        %v1058 = vld [vmem:[%s4 + $0x10] sm:$0xff]
        %v1059 = vld [vmem:[%s4 + $0x18] sm:$0xff]
        %v1060 = vld [vmem:[%s4 + $0x20] sm:$0xff]
        %v1061 = vld [vmem:[%s4 + $0x28] sm:$0xff]
        %v1062 = vld [vmem:[%s4 + $0x30] sm:$0xff]
        %v1063 = vld [vmem:[%s4 + $0x38] sm:$0xff]
        %v1064 = vld [vmem:[%s5] sm:$0x1]
        %v1066 = vlaneseq
        %v1067 = vshrl.u32 %v1066, 7
        %v1068 = vsub.s32 0, %v1067
        %v1069 = vrot.slane %v1064, %v1068
        %v1072 = vsel %vm362, %v1055, 0
        %1074 = vmatprep.subr.mxu0 0.0
        %1075 = vmatpush1.msra.mxu0 %v1056
        %1076 = vmatprep.subr.mxu0 0.0
        %1077 = vmatpush1.msra.mxu0 %v1057
        %1078 = vmatprep.subr.mxu0 0.0
        %1079 = vmatpush1.msra.mxu0 %v1058
        %1080 = vmatprep.subr.mxu0 0.0
        %1081 = vmatpush1.msra.mxu0 %v1059
        %1082 = vmatprep.subr.mxu0 0.0
        %1083 = vmatpush1.msra.mxu0 %v1060
        %1084 = vmatprep.subr.mxu0 0.0
        %1085 = vmatpush1.msra.mxu0 %v1061
        %1086 = vmatprep.subr.mxu0 0.0
        %1087 = vmatpush1.msra.mxu0 %v1062
        %1088 = vmatprep.subr.mxu0 0.0
        %1089 = vmatpush1.msra.mxu0 %v1063
        %1090 = vmatprep.subr.mxu0 0.0
        %1091 = vmatpush1.msra.mxu0 0.0
        %1092 = vmatprep.subr.mxu0 0.0
        %1093 = vmatpush1.msra.mxu0 0.0
        %1094 = vmatprep.subr.mxu0 0.0
        %1095 = vmatpush1.msra.mxu0 0.0
        %1096 = vmatprep.subr.mxu0 0.0
        %1097 = vmatpush1.msra.mxu0 0.0
        %1098 = vmatprep.subr.mxu0 0.0
        %1099 = vmatpush1.msra.mxu0 0.0
        %1100 = vmatprep.subr.mxu0 0.0
        %1101 = vmatpush1.msra.mxu0 0.0
        %1102 = vmatprep.subr.mxu0 0.0
        %1103 = vmatpush1.msra.mxu0 0.0
        %1104 = vmatprep.subr.mxu0 0.0
        %1105 = vmatpush1.msra.mxu0 0.0
        %1106 = vmatprep.subr.mxu0 0.0
        %1107 = vmatpush1.msra.mxu0 0.0
        %1108 = vmatprep.subr.mxu0 0.0
        %1109 = vmatpush1.msra.mxu0 0.0
        %1110 = vmatprep.subr.mxu0 0.0
        %1111 = vmatpush1.msra.mxu0 0.0
        %1112 = vmatprep.subr.mxu0 0.0
        %1113 = vmatpush1.msra.mxu0 0.0
        %1114 = vmatprep.subr.mxu0 0.0
        %1115 = vmatpush1.msra.mxu0 0.0
        %1116 = vmatprep.subr.mxu0 0.0
        %1117 = vmatpush1.msra.mxu0 0.0
        %1118 = vmatprep.subr.mxu0 0.0
        %1119 = vmatpush1.msra.mxu0 0.0
        %1120 = vmatprep.subr.mxu0 0.0
        %1121 = vmatpush1.msra.mxu0 0.0
        %1122 = vmatprep.subr.mxu0 0.0
        %1123 = vmatpush1.msra.mxu0 0.0
        %1124 = vmatprep.subr.mxu0 0.0
        %1125 = vmatpush1.msra.mxu0 0.0
        %1126 = vmatprep.subr.mxu0 0.0
        %1127 = vmatpush1.msra.mxu0 0.0
        %1128 = vmatprep.subr.mxu0 0.0
        %1129 = vmatpush1.msra.mxu0 0.0
        %1130 = vmatprep.subr.mxu0 0.0
        %1131 = vmatpush1.msra.mxu0 0.0
        %1132 = vmatprep.subr.mxu0 0.0
        %1133 = vmatpush1.msra.mxu0 0.0
        %1134 = vmatprep.subr.mxu0 0.0
        %1135 = vmatpush1.msra.mxu0 0.0
        %1136 = vmatprep.subr.mxu0 0.0
        %1137 = vmatpush1.msra.mxu0 0.0
        %1138 = vmatprep.mubr.f32.mxu0 0.0
        %1139 = vmatmul.mubr.f32.gmra.mrb[0].mxu0 %v1072
        %v1140 = vpop.f32.mrb[0].mxu0
        %v1141 = vadd.f32 %v1069, %v1140
        %v1142 = vpop.f32.mrb[0].mxu0
        %1143 = vdwg.mxu0
        %1144 = vst.msk [vmem:[%s242] sm:$0xff] %vm248, %v1141
        %s1145 = sand.u32 %s159, 1
        %s1146 = scalar_lea.sflag [#allocation5], %s1145
        %s1147 = sand.u32 %s159, 1
        %s1148 = smul.addr %s1147, 8
        %s1149 = scalar_lea.vmem [#allocation4], %s1148
        // Predicated region
        $region45: #{attention.1} parent=43 // pred_check
          %p1150 = pneg %p169
        $region46: #{attention.1} parent=43 // pred_check_branch
          %1152 = sbr.rel (%p1150) target = $region48
        $region47: #{attention.1} parent=43 // pred_region
          %s1154 = ssub.s32 128, 128
          %1155 = vsyncadd %s1146, %s1154
          %s1156 = smul.addr %s20, 128
          %s1157 = scalar_lea.hbm %s6, %s1156
          %s1159 = sshll.u32 %s1149, 4
          %s1160 = int_to_ptr.vmem [resolvable:$true] %s1159
          %1162 = dma.vmem_to_hbm [thread:$0]  %s1160, 128, %s1157, %s1146
        $region48: #{attention.1} parent=43 // pred_fallthru
          _
      $region44: #{attention.1} parent=5 // pred_fallthru
        _
      %p1163 = scmp.le.s32.totalorder 2, %s15
      // Predicated region
      $region49: #{attention.1} parent=5 // pred_check
        %p1164 = pneg %p1163
      $region50: #{attention.1} parent=5 // pred_check_branch
        %1166 = sbr.rel (%p1164) target = $region52
      $region51: #{attention.1} parent=5 // pred_region
        %s1167 = ssub.s32 %s15, 2
        // Predicated region
        $region53: #{attention.1} parent=51 // pred_check
          %p1168 = pneg %p175
        $region54: #{attention.1} parent=51 // pred_check_branch
          %1170 = sbr.rel (%p1168) target = $region56
        $region55: #{attention.1} parent=51 // pred_region
          %s1171 = sand.u32 %s160, 1
          %s1172 = scalar_lea.sflag [#allocation5], %s1171
          %s1173 = sand.u32 %s160, 1
          %s1174 = smul.addr %s1173, 8
          %s1175 = scalar_lea.vmem [#allocation4], %s1174
          %1176 = dma.done %s1172, 128
        $region56: #{attention.1} parent=51 // pred_fallthru
          _
      $region52: #{attention.1} parent=5 // pred_fallthru
        _
    $region6: #{attention.1} parent=1 // loop_footer
      %s19 = sadd.s32 1, %s15
    $region7: #{attention.1} parent=1 // loop_footer_branch
      %14 = sbr.rel target = $region3
    $region8: #{attention.1} parent=1 // loop_exit
      _
    %1177 = vsyncpa [#allocation5], 1
    %s1178 = scalar_lea.sflag [#allocation5], 1
    %1179 = vsyncpa %s1178, 1

</llo_original>
